<compile_context>
chip_gen: v7x
topology: tpu7x:2x2x1
jax: 0.10.0
libtpu: 0.0.40
codegen_flags: <defaults>
</compile_context>

<pallas_src>
import jax
import jax.numpy as jnp
import numpy as np
from jax.experimental import pallas as pl
from jax.experimental.pallas import tpu as pltpu

HIDDEN = 64


def _round_up(x, m):
    return (x + m - 1) // m * m


# --------------------------------------------------------------------------- #
# Kernels
# --------------------------------------------------------------------------- #
def _sage_layer_kernel(a_ref, xk_ref, xi_ref, wcat_ref, b_ref, o_ref, acc_ref):
    """One SAGEConv(mean) + ReLU for a TM-row block of nodes.

    grid = (row blocks ["parallel"], A column blocks ["arbitrary" reduction]).
    acc_ref : f32 [TM, 2F] scratch holding [agg | x_root] across the reduction.
    """
    f = xk_ref.shape[1]
    k = pl.program_id(1)

    @pl.when(k == 0)
    def _init():
        acc_ref[...] = jnp.zeros_like(acc_ref)
        acc_ref[:, f:] = xi_ref[...].astype(jnp.float32)   # root features

    # Stream A tile-by-tile: bf16 MXU inputs, f32 accumulation.
    acc_ref[:, :f] += jnp.dot(a_ref[...], xk_ref[...],
                              preferred_element_type=jnp.float32)

    @pl.when(k == pl.num_programs(1) - 1)
    def _finalize():
        cat = acc_ref[...].astype(jnp.bfloat16)             # [TM, 2F] = [agg | x]
        h = jnp.dot(cat, wcat_ref[...],                     # single fused projection
                    preferred_element_type=jnp.float32) + b_ref[...]
        o_ref[...] = jnp.maximum(h, 0.0).astype(o_ref.dtype)


def _sage_layer_fc_kernel(a_ref, xk_ref, xi_ref, wcat_ref, b_ref,
                          wfc_ref, bfc_ref, o_ref, acc_ref):
    """Second SAGEConv(mean) + ReLU fused with the final Linear(64, 1)."""
    f = xk_ref.shape[1]
    k = pl.program_id(1)

    @pl.when(k == 0)
    def _init():
        acc_ref[...] = jnp.zeros_like(acc_ref)
        acc_ref[:, f:] = xi_ref[...].astype(jnp.float32)

    acc_ref[:, :f] += jnp.dot(a_ref[...], xk_ref[...],
                              preferred_element_type=jnp.float32)

    @pl.when(k == pl.num_programs(1) - 1)
    def _finalize():
        cat = acc_ref[...].astype(jnp.bfloat16)
        h = jnp.dot(cat, wcat_ref[...],
                    preferred_element_type=jnp.float32) + b_ref[...]
        h = jnp.maximum(h, 0.0)
        # fc (64 -> 1) as a VPU/XLU reduction, not a 1-column MXU matmul.
        val = jnp.sum(h * wfc_ref[...], axis=-1, keepdims=True) + bfc_ref[...]
        # Lane-dense [TM, 128] output slab (sliced to [:, :1] in the wrapper).
        o_ref[...] = jnp.broadcast_to(val, o_ref.shape)


# --------------------------------------------------------------------------- #
# pallas_call wrappers
# --------------------------------------------------------------------------- #
_COMPILER_PARAMS = pltpu.CompilerParams(
    dimension_semantics=("parallel", "arbitrary"),
    vmem_limit_bytes=32 * 1024 * 1024,
)


def _sage_layer(a_p, x_p, wcat, b, *, tm, tk):
    n_pad = a_p.shape[0]
    f = x_p.shape[1]
    h = wcat.shape[1]
    return pl.pallas_call(
        _sage_layer_kernel,
        out_shape=jax.ShapeDtypeStruct((n_pad, h), jnp.bfloat16),
        grid_spec=pltpu.PrefetchScalarGridSpec(
            num_scalar_prefetch=0,
            grid=(n_pad // tm, n_pad // tk),
            in_specs=[
                pl.BlockSpec((tm, tk), lambda i, k: (i, k)),    # A[i-block, k-block]
                pl.BlockSpec((tk, f), lambda i, k: (k, 0)),     # x rows for aggregation
                pl.BlockSpec((tm, f), lambda i, k: (i, 0)),     # x rows for root term
                pl.BlockSpec((2 * f, h), lambda i, k: (0, 0)),  # [W_l ; W_r]
                pl.BlockSpec((1, h), lambda i, k: (0, 0)),      # bias
            ],
            out_specs=pl.BlockSpec((tm, h), lambda i, k: (i, 0)),
            scratch_shapes=[pltpu.VMEM((tm, 2 * f), jnp.float32)],
        ),
        compiler_params=_COMPILER_PARAMS,
    )(a_p, x_p, x_p, wcat, b)


def _sage_layer_fc(a_p, x_p, wcat, b, wfc, bfc, *, tm, tk):
    n_pad = a_p.shape[0]
    f = x_p.shape[1]
    h = wcat.shape[1]
    return pl.pallas_call(
        _sage_layer_fc_kernel,
        out_shape=jax.ShapeDtypeStruct((n_pad, 128), jnp.float32),
        grid_spec=pltpu.PrefetchScalarGridSpec(
            num_scalar_prefetch=0,
            grid=(n_pad // tm, n_pad // tk),
            in_specs=[
                pl.BlockSpec((tm, tk), lambda i, k: (i, k)),
                pl.BlockSpec((tk, f), lambda i, k: (k, 0)),
                pl.BlockSpec((tm, f), lambda i, k: (i, 0)),
                pl.BlockSpec((2 * f, h), lambda i, k: (0, 0)),
                pl.BlockSpec((1, h), lambda i, k: (0, 0)),      # bias
                pl.BlockSpec((1, h), lambda i, k: (0, 0)),      # w_fc row
                pl.BlockSpec((1, 1), lambda i, k: (0, 0)),      # b_fc
            ],
            out_specs=pl.BlockSpec((tm, 128), lambda i, k: (i, 0)),
            scratch_shapes=[pltpu.VMEM((tm, 2 * f), jnp.float32)],
        ),
        compiler_params=_COMPILER_PARAMS,
    )(a_p, x_p, x_p, wcat, b, wfc, bfc)


def emb_model_forward(a_norm, x, params, *, block=256):
    """Full Emb_model forward: 2x (SAGEConv(mean)+ReLU) then Linear(64,1) -> [N, 1]."""
    n, _ = x.shape
    # Row / reduction tile of the adjacency. 256 suits v6e/v7x; pass block=128 on v5e.
    tm = tk = min(block, _round_up(n, 128))
    n_pad = _round_up(n, tm)
    pad_n = n_pad - n

    # Pad (zero rows/cols contribute nothing and are sliced off) + bf16 MXU operands.
    a_p = jnp.pad(a_norm, ((0, pad_n), (0, pad_n))).astype(jnp.bfloat16)
    x_p = jnp.pad(x, ((0, pad_n), (0, 0))).astype(jnp.bfloat16)

    # Fused projection weights [W_l ; W_r] (stored [in, out] so the kernel does x @ W).
    w1cat = jnp.concatenate([params["w1l"], params["w1r"]], axis=0).astype(jnp.bfloat16)
    w2cat = jnp.concatenate([params["w2l"], params["w2r"]], axis=0).astype(jnp.bfloat16)
    b1 = params["b1"].astype(jnp.float32)
    b2 = params["b2"].astype(jnp.float32)
    wfc = params["wfc"].T.astype(jnp.float32)   # [1, 64]
    bfc = params["bfc"].astype(jnp.float32)     # [1, 1]

    h1 = _sage_layer(a_p, x_p, w1cat, b1, tm=tm, tk=tk)                # [n_pad, 64] bf16
    out = _sage_layer_fc(a_p, h1, w2cat, b2, wfc, bfc, tm=tm, tk=tk)   # [n_pad, 128] f32
    return out[:n, :1]


# --------------------------------------------------------------------------- #
# Graph / parameter helpers + pure-JAX reference
# --------------------------------------------------------------------------- #
def build_normalized_adjacency(edge_index, num_nodes):
    # A[dst, src] counts edges (duplicates included, matching PyG scatter_mean);
    # row-normalize by in-degree so A @ x is the mean of in-neighbor features.
    src, dst = edge_index
    a = jnp.zeros((num_nodes, num_nodes), jnp.float32).at[dst, src].add(1.0)
    deg = a.sum(axis=1, keepdims=True)
    return a / jnp.maximum(deg, 1.0)


def init_params(key, f_in):
    ks = jax.random.split(key, 6)

    def glorot(k, shape):
        lim = np.sqrt(6.0 / (shape[0] + shape[1]))
        return jax.random.uniform(k, shape, jnp.float32, -lim, lim)

    return {
        # weights stored transposed ([in, out]) so the kernel does x @ W
        "w1l": glorot(ks[0], (f_in, HIDDEN)),
        "w1r": glorot(ks[1], (f_in, HIDDEN)),
        "b1": jnp.zeros((1, HIDDEN), jnp.float32),
        "w2l": glorot(ks[2], (HIDDEN, HIDDEN)),
        "w2r": glorot(ks[3], (HIDDEN, HIDDEN)),
        "b2": jnp.zeros((1, HIDDEN), jnp.float32),
        "wfc": glorot(ks[4], (HIDDEN, 1)),
        "bfc": jnp.zeros((1, 1), jnp.float32),
    }


def reference_forward(a_norm, x, p):
    h1 = jnp.maximum(a_norm @ x @ p["w1l"] + x @ p["w1r"] + p["b1"], 0.0)
    h2 = jnp.maximum(a_norm @ h1 @ p["w2l"] + h1 @ p["w2r"] + p["b2"], 0.0)
    return h2 @ p["wfc"] + p["bfc"]


if __name__ == "__main__":
    key = jax.random.PRNGKey(0)
    k_x, k_e, k_p = jax.random.split(key, 3)

    N, F_IN, E = 16, 32, 48          # small homogeneous graph (single node/edge type)
    x = jax.random.normal(k_x, (N, F_IN), jnp.float32)
    edge_index = jax.random.randint(k_e, (2, E), 0, N)   # [2, E] (src, dst)

    a_norm = build_normalized_adjacency(edge_index, N)
    params = init_params(k_p, F_IN)

    out = emb_model_forward(a_norm, x, params)
    out = jax.block_until_ready(out)

    ref = reference_forward(a_norm, x, params)
    assert out.shape == (N, 1)
    # bf16 MXU inputs with f32 accumulation -> compare against the f32 reference
    # with bf16-appropriate tolerances.
    np.testing.assert_allclose(np.asarray(out), np.asarray(ref), rtol=2e-2, atol=5e-2)
    print("KERNEL_OK")
</pallas_src>

<mosaic_0001>
module attributes {stable_mosaic.version = 11 : i64} {
  func.func @_sage_layer_kernel(%arg0: i32, %arg1: i32, %arg2: memref<128x128xbf16, #tpu.memory_space<vmem>>, %arg3: memref<128x32xbf16, #tpu.memory_space<vmem>>, %arg4: memref<128x32xbf16, #tpu.memory_space<vmem>>, %arg5: memref<64x64xbf16, #tpu.memory_space<vmem>>, %arg6: memref<1x64xf32, #tpu.memory_space<vmem>>, %arg7: memref<128x64xbf16, #tpu.memory_space<vmem>>, %arg8: memref<128x64xf32, #tpu.memory_space<vmem>>) attributes {dimension_semantics = [#tpu.dimension_semantics<parallel>, #tpu.dimension_semantics<arbitrary>], iteration_bounds = array<i64: 1, 1>, scalar_prefetch = 0 : i64, scratch_operands = 1 : i64, tpu.core_type = #tpu.core_type<tc>, window_params = [{transform_indices = @transform_0, window_bounds = array<i64: 128, 128>}, {transform_indices = @transform_1, window_bounds = array<i64: 128, 32>}, {transform_indices = @transform_2, window_bounds = array<i64: 128, 32>}, {pipeline_mode = #tpu.pipeline_mode<synchronous>, transform_indices = @transform_3, window_bounds = array<i64: 64, 64>}, {pipeline_mode = #tpu.pipeline_mode<synchronous>, transform_indices = @transform_4, window_bounds = array<i64: 1, 64>}, {transform_indices = @transform_5, window_bounds = array<i64: 128, 64>}]} {
    %c0_i32 = arith.constant 0 : i32
    %0 = arith.cmpi eq, %arg1, %c0_i32 : i32
    %1 = arith.extui %0 : i1 to i32
    %c0_i32_0 = arith.constant 0 : i32
    %2 = arith.cmpi ne, %1, %c0_i32_0 : i32
    scf.if %2 {
      %cst_10 = arith.constant 0.000000e+00 : f32
      %12 = vector.broadcast %cst_10 : f32 to vector<128x64xf32>
      %c0_11 = arith.constant 0 : index
      %c0_12 = arith.constant 0 : index
      %13 = vector.load %arg8[%c0_11, %c0_12] : memref<128x64xf32, #tpu.memory_space<vmem>>, vector<128x64xf32>
      tpu.vector_store %arg8[%c0_11, %c0_12], %12 {strides = array<i32>} : memref<128x64xf32, #tpu.memory_space<vmem>>, vector<128x64xf32>,
      %c0_13 = arith.constant 0 : index
      %c0_14 = arith.constant 0 : index
      %14 = vector.load %arg4[%c0_13, %c0_14] : memref<128x32xbf16, #tpu.memory_space<vmem>>, vector<128x32xbf16>
      %15 = arith.extf %14 : vector<128x32xbf16> to vector<128x32xf32>
      %c0_15 = arith.constant 0 : index
      %c32 = arith.constant 32 : index
      %16 = vector.load %arg8[%c0_15, %c32] : memref<128x64xf32, #tpu.memory_space<vmem>>, vector<128x32xf32>
      tpu.vector_store %arg8[%c0_15, %c32], %15 {strides = array<i32>} : memref<128x64xf32, #tpu.memory_space<vmem>>, vector<128x32xf32>,
    } else {
    }
    %c0 = arith.constant 0 : index
    %c0_1 = arith.constant 0 : index
    %3 = vector.load %arg8[%c0, %c0_1] : memref<128x64xf32, #tpu.memory_space<vmem>>, vector<128x32xf32>
    %c0_2 = arith.constant 0 : index
    %c0_3 = arith.constant 0 : index
    %4 = vector.load %arg2[%c0_2, %c0_3] : memref<128x128xbf16, #tpu.memory_space<vmem>>, vector<128x128xbf16>
    %c0_4 = arith.constant 0 : index
    %c0_5 = arith.constant 0 : index
    %5 = vector.load %arg3[%c0_4, %c0_5] : memref<128x32xbf16, #tpu.memory_space<vmem>>, vector<128x32xbf16>
    %cst = arith.constant dense<0.000000e+00> : vector<128x32xf32>
    %6 = tpu.matmul %4, %5, %cst {dimension_numbers = #tpu.dot_dimension_numbers<[1], [0], [0], [1], [0, 0, 1, 1], [], []>} : vector<128x128xbf16>, vector<128x32xbf16>, vector<128x32xf32> -> vector<128x32xf32>
    %7 = arith.addf %3, %6 : vector<128x32xf32>
    %c0_6 = arith.constant 0 : index
    %c0_7 = arith.constant 0 : index
    %8 = vector.load %arg8[%c0_6, %c0_7] : memref<128x64xf32, #tpu.memory_space<vmem>>, vector<128x32xf32>
    tpu.vector_store %arg8[%c0_6, %c0_7], %7 {strides = array<i32>} : memref<128x64xf32, #tpu.memory_space<vmem>>, vector<128x32xf32>,
    %c0_i32_8 = arith.constant 0 : i32
    %9 = arith.cmpi eq, %arg1, %c0_i32_8 : i32
    %10 = arith.extui %9 : i1 to i32
    %c0_i32_9 = arith.constant 0 : i32
    %11 = arith.cmpi ne, %10, %c0_i32_9 : i32
    scf.if %11 {
      %c0_10 = arith.constant 0 : index
      %c0_11 = arith.constant 0 : index
      %12 = vector.load %arg8[%c0_10, %c0_11] : memref<128x64xf32, #tpu.memory_space<vmem>>, vector<128x64xf32>
      %13 = arith.truncf %12 : vector<128x64xf32> to vector<128x64xbf16>
      %c0_12 = arith.constant 0 : index
      %c0_13 = arith.constant 0 : index
      %14 = vector.load %arg5[%c0_12, %c0_13] : memref<64x64xbf16, #tpu.memory_space<vmem>>, vector<64x64xbf16>
      %cst_14 = arith.constant dense<0.000000e+00> : vector<128x64xf32>
      %15 = tpu.matmul %13, %14, %cst_14 {dimension_numbers = #tpu.dot_dimension_numbers<[1], [0], [0], [1], [0, 0, 1, 1], [], []>} : vector<128x64xbf16>, vector<64x64xbf16>, vector<128x64xf32> -> vector<128x64xf32>
      %c0_15 = arith.constant 0 : index
      %c0_16 = arith.constant 0 : index
      %16 = vector.load %arg6[%c0_15, %c0_16] : memref<1x64xf32, #tpu.memory_space<vmem>>, vector<1x64xf32>
      %17 = vector.broadcast %16 : vector<1x64xf32> to vector<128x64xf32>
      %18 = arith.addf %15, %17 : vector<128x64xf32>
      %cst_17 = arith.constant 0.000000e+00 : f32
      %19 = vector.broadcast %cst_17 : f32 to vector<128x64xf32>
      %20 = arith.maximumf %18, %19 : vector<128x64xf32>
      %21 = arith.truncf %20 : vector<128x64xf32> to vector<128x64xbf16>
      %c0_18 = arith.constant 0 : index
      %c0_19 = arith.constant 0 : index
      %22 = vector.load %arg7[%c0_18, %c0_19] : memref<128x64xbf16, #tpu.memory_space<vmem>>, vector<128x64xbf16>
      tpu.vector_store %arg7[%c0_18, %c0_19], %21 {strides = array<i32>} : memref<128x64xbf16, #tpu.memory_space<vmem>>, vector<128x64xbf16>,
    } else {
    }
    return
  }
  func.func @transform_0(%arg0: i32, %arg1: i32) -> (i32, i32) {
    %c0_i32 = arith.constant 0 : i32
    return %arg0, %arg1 : i32, i32
  }
  func.func @transform_1(%arg0: i32, %arg1: i32) -> (i32, i32) {
    %c0_i32 = arith.constant 0 : i32
    %c0_i32_0 = arith.constant 0 : i32
    return %arg1, %c0_i32 : i32, i32
  }
  func.func @transform_2(%arg0: i32, %arg1: i32) -> (i32, i32) {
    %c0_i32 = arith.constant 0 : i32
    %c0_i32_0 = arith.constant 0 : i32
    return %arg0, %c0_i32 : i32, i32
  }
  func.func @transform_3(%arg0: i32, %arg1: i32) -> (i32, i32) {
    %c0_i32 = arith.constant 0 : i32
    %c0_i32_0 = arith.constant 0 : i32
    %c0_i32_1 = arith.constant 0 : i32
    return %c0_i32, %c0_i32_0 : i32, i32
  }
  func.func @transform_4(%arg0: i32, %arg1: i32) -> (i32, i32) {
    %c0_i32 = arith.constant 0 : i32
    %c0_i32_0 = arith.constant 0 : i32
    %c0_i32_1 = arith.constant 0 : i32
    return %c0_i32, %c0_i32_0 : i32, i32
  }
  func.func @transform_5(%arg0: i32, %arg1: i32) -> (i32, i32) {
    %c0_i32 = arith.constant 0 : i32
    %c0_i32_0 = arith.constant 0 : i32
    return %arg0, %c0_i32 : i32, i32
  }
}

</mosaic_0001>

<llo_original>
// kernel: tpu_custom_call.1
$region0: #{tpu_custom_call.1}
  #allocation0 [shape = 'u32[]', space=smem, size = 0x4, offset = 0x4, fixed_abs, tag = 'smem constant byte address 0x4 - core index']
  #allocation1 [shape = 'u32[144,128]{1,0:T(1,128)}', space=vmem, size = 0x12000, scoped, tag = 'internal scratch']
  #allocation2 [shape = 'f32[128,64]{1,0:T(8,128)}', space=vmem, size = 0x10000, scoped, tag = 'scratch operand']
  %s0 = inlined_call_operand.vmem [shape: bf16[128,128], index: 0, kind: input, shape index: {}]
  %s1 = inlined_call_operand.vmem [shape: bf16[128,32], index: 1, kind: input, shape index: {}]
  %s2 = inlined_call_operand.vmem [shape: bf16[128,32], index: 2, kind: input, shape index: {}]
  %s3 = inlined_call_operand.vmem [shape: bf16[64,64], index: 3, kind: input, shape index: {}]
  %s4 = inlined_call_operand.vmem [shape: f32[1,64], index: 4, kind: input, shape index: {}]
  %s5 = inlined_call_operand.vmem [shape: bf16[128,64], index: 5, kind: output, shape index: {}]
  %s6 = sld [smem:[#allocation0]]
  $region38: #{tpu_custom_call.1} parent=0
    _
  %s8 = ssub.s32 1, %s6
  %s9 = scalar_select 0, %s8, %s6
  // Predicated region
  $region2: #{tpu_custom_call.1} parent=0 // pred_check
    _
  $region3: #{tpu_custom_call.1} parent=0 // pred_check_branch
    %11 = sbr.rel (0) target = $region5
  $region4: #{tpu_custom_call.1} parent=0 // pred_region
    _
  $region5: #{tpu_custom_call.1} parent=0 // pred_fallthru
    _
  // Predicated region
  $region6: #{tpu_custom_call.1} parent=0 // pred_check
    _
  $region7: #{tpu_custom_call.1} parent=0 // pred_check_branch
    %13 = sbr.rel (0) target = $region9
  $region8: #{tpu_custom_call.1} parent=0 // pred_region
    _
  $region9: #{tpu_custom_call.1} parent=0 // pred_fallthru
    _
  // Predicated region
  $region10: #{tpu_custom_call.1} parent=0 // pred_check
    _
  $region11: #{tpu_custom_call.1} parent=0 // pred_check_branch
    %15 = sbr.rel (0) target = $region13
  $region12: #{tpu_custom_call.1} parent=0 // pred_region
    _
  $region13: #{tpu_custom_call.1} parent=0 // pred_fallthru
    _
  // Predicated region
  $region14: #{tpu_custom_call.1} parent=0 // pred_check
    _
  $region15: #{tpu_custom_call.1} parent=0 // pred_check_branch
    %17 = sbr.rel (0) target = $region17
  $region16: #{tpu_custom_call.1} parent=0 // pred_region
    _
  $region17: #{tpu_custom_call.1} parent=0 // pred_fallthru
    _
  // Predicated region
  $region18: #{tpu_custom_call.1} parent=0 // pred_check
    _
  $region19: #{tpu_custom_call.1} parent=0 // pred_check_branch
    %19 = sbr.rel (0) target = $region21
  $region20: #{tpu_custom_call.1} parent=0 // pred_region
    _
  $region21: #{tpu_custom_call.1} parent=0 // pred_fallthru
    _
  %p21 = scmp.eq.s32.totalorder 0, 0
  // Predicated region
  $region22: #{tpu_custom_call.1} parent=0 // pred_check
    %p22 = pneg %p21
  $region23: #{tpu_custom_call.1} parent=0 // pred_check_branch
    %24 = sbr.rel (%p22) target = $region25
  $region24: #{tpu_custom_call.1} parent=0 // pred_region
    %vm25 = vcmask 523264
    %26 = vst.msk [vmem:[#allocation2] sm:$0xff] %vm25, 0.0
    %27 = vst.msk [vmem:[#allocation2 + $0x8] sm:$0xff] %vm25, 0.0
    %28 = vst.msk [vmem:[#allocation2 + $0x10] sm:$0xff] %vm25, 0.0
    %29 = vst.msk [vmem:[#allocation2 + $0x18] sm:$0xff] %vm25, 0.0
    %30 = vst.msk [vmem:[#allocation2 + $0x20] sm:$0xff] %vm25, 0.0
    %31 = vst.msk [vmem:[#allocation2 + $0x28] sm:$0xff] %vm25, 0.0
    %32 = vst.msk [vmem:[#allocation2 + $0x30] sm:$0xff] %vm25, 0.0
    %33 = vst.msk [vmem:[#allocation2 + $0x38] sm:$0xff] %vm25, 0.0
    %34 = vst.msk [vmem:[#allocation2 + $0x40] sm:$0xff] %vm25, 0.0
    %35 = vst.msk [vmem:[#allocation2 + $0x48] sm:$0xff] %vm25, 0.0
    %36 = vst.msk [vmem:[#allocation2 + $0x50] sm:$0xff] %vm25, 0.0
    %37 = vst.msk [vmem:[#allocation2 + $0x58] sm:$0xff] %vm25, 0.0
    %38 = vst.msk [vmem:[#allocation2 + $0x60] sm:$0xff] %vm25, 0.0
    %39 = vst.msk [vmem:[#allocation2 + $0x68] sm:$0xff] %vm25, 0.0
    %40 = vst.msk [vmem:[#allocation2 + $0x70] sm:$0xff] %vm25, 0.0
    %41 = vst.msk [vmem:[#allocation2 + $0x78] sm:$0xff] %vm25, 0.0
    %v42 = vld [vmem:[%s2] sm:$0xf]
    %v43 = vld [vmem:[%s2 + $0x4] sm:$0xf]
    %v44 = vld [vmem:[%s2 + $0x8] sm:$0xf]
    %v45 = vld [vmem:[%s2 + $0xc] sm:$0xf]
    %v46 = vld [vmem:[%s2 + $0x10] sm:$0xf]
    %v47 = vld [vmem:[%s2 + $0x14] sm:$0xf]
    %v48 = vld [vmem:[%s2 + $0x18] sm:$0xf]
    %v49 = vld [vmem:[%s2 + $0x1c] sm:$0xf]
    %v50 = vld [vmem:[%s2 + $0x20] sm:$0xf]
    %v51 = vld [vmem:[%s2 + $0x24] sm:$0xf]
    %v52 = vld [vmem:[%s2 + $0x28] sm:$0xf]
    %v53 = vld [vmem:[%s2 + $0x2c] sm:$0xf]
    %v54 = vld [vmem:[%s2 + $0x30] sm:$0xf]
    %v55 = vld [vmem:[%s2 + $0x34] sm:$0xf]
    %v56 = vld [vmem:[%s2 + $0x38] sm:$0xf]
    %v57 = vld [vmem:[%s2 + $0x3c] sm:$0xf]
    %v58 = vunpack.c.l.bf16 %v42
    %v59 = vunpack.c.l.bf16 %v43
    %v60 = vunpack.c.l.bf16 %v44
    %v61 = vunpack.c.l.bf16 %v45
    %v62 = vunpack.c.l.bf16 %v46
    %v63 = vunpack.c.l.bf16 %v47
    %v64 = vunpack.c.l.bf16 %v48
    %v65 = vunpack.c.l.bf16 %v49
    %v66 = vunpack.c.l.bf16 %v50
    %v67 = vunpack.c.l.bf16 %v51
    %v68 = vunpack.c.l.bf16 %v52
    %v69 = vunpack.c.l.bf16 %v53
    %v70 = vunpack.c.l.bf16 %v54
    %v71 = vunpack.c.l.bf16 %v55
    %v72 = vunpack.c.l.bf16 %v56
    %v73 = vunpack.c.l.bf16 %v57
    %90 = vrot.lane.b32.xlu0 %v58, 32
    %v91 = vpop.permute.xlu0 %90
    %92 = vrot.lane.b32.xlu0 %v59, 32
    %v93 = vpop.permute.xlu0 %92
    %94 = vrot.lane.b32.xlu0 %v60, 32
    %v95 = vpop.permute.xlu0 %94
    %96 = vrot.lane.b32.xlu0 %v61, 32
    %v97 = vpop.permute.xlu0 %96
    %98 = vrot.lane.b32.xlu0 %v62, 32
    %v99 = vpop.permute.xlu0 %98
    %100 = vrot.lane.b32.xlu0 %v63, 32
    %v101 = vpop.permute.xlu0 %100
    %102 = vrot.lane.b32.xlu0 %v64, 32
    %v103 = vpop.permute.xlu0 %102
    %104 = vrot.lane.b32.xlu0 %v65, 32
    %v105 = vpop.permute.xlu0 %104
    %106 = vrot.lane.b32.xlu0 %v66, 32
    %v107 = vpop.permute.xlu0 %106
    %108 = vrot.lane.b32.xlu0 %v67, 32
    %v109 = vpop.permute.xlu0 %108
    %110 = vrot.lane.b32.xlu0 %v68, 32
    %v111 = vpop.permute.xlu0 %110
    %112 = vrot.lane.b32.xlu0 %v69, 32
    %v113 = vpop.permute.xlu0 %112
    %114 = vrot.lane.b32.xlu0 %v70, 32
    %v115 = vpop.permute.xlu0 %114
    %116 = vrot.lane.b32.xlu0 %v71, 32
    %v117 = vpop.permute.xlu0 %116
    %118 = vrot.lane.b32.xlu0 %v72, 32
    %v119 = vpop.permute.xlu0 %118
    %120 = vrot.lane.b32.xlu0 %v73, 32
    %v121 = vpop.permute.xlu0 %120
    %vm138 = vcmask 523520
    %139 = vst.msk [vmem:[#allocation2] sm:$0xff] %vm138, %v91
    %140 = vst.msk [vmem:[#allocation2 + $0x8] sm:$0xff] %vm138, %v93
    %141 = vst.msk [vmem:[#allocation2 + $0x10] sm:$0xff] %vm138, %v95
    %142 = vst.msk [vmem:[#allocation2 + $0x18] sm:$0xff] %vm138, %v97
    %143 = vst.msk [vmem:[#allocation2 + $0x20] sm:$0xff] %vm138, %v99
    %144 = vst.msk [vmem:[#allocation2 + $0x28] sm:$0xff] %vm138, %v101
    %145 = vst.msk [vmem:[#allocation2 + $0x30] sm:$0xff] %vm138, %v103
    %146 = vst.msk [vmem:[#allocation2 + $0x38] sm:$0xff] %vm138, %v105
    %147 = vst.msk [vmem:[#allocation2 + $0x40] sm:$0xff] %vm138, %v107
    %148 = vst.msk [vmem:[#allocation2 + $0x48] sm:$0xff] %vm138, %v109
    %149 = vst.msk [vmem:[#allocation2 + $0x50] sm:$0xff] %vm138, %v111
    %150 = vst.msk [vmem:[#allocation2 + $0x58] sm:$0xff] %vm138, %v113
    %151 = vst.msk [vmem:[#allocation2 + $0x60] sm:$0xff] %vm138, %v115
    %152 = vst.msk [vmem:[#allocation2 + $0x68] sm:$0xff] %vm138, %v117
    %153 = vst.msk [vmem:[#allocation2 + $0x70] sm:$0xff] %vm138, %v119
    %154 = vst.msk [vmem:[#allocation2 + $0x78] sm:$0xff] %vm138, %v121
  $region25: #{tpu_custom_call.1} parent=0 // pred_fallthru
    _
  %v155 = vld [vmem:[#allocation2] sm:$0xff]
  %v156 = vld [vmem:[#allocation2 + $0x8] sm:$0xff]
  %v157 = vld [vmem:[#allocation2 + $0x10] sm:$0xff]
  %v158 = vld [vmem:[#allocation2 + $0x18] sm:$0xff]
  %v159 = vld [vmem:[#allocation2 + $0x20] sm:$0xff]
  %v160 = vld [vmem:[#allocation2 + $0x28] sm:$0xff]
  %v161 = vld [vmem:[#allocation2 + $0x30] sm:$0xff]
  %v162 = vld [vmem:[#allocation2 + $0x38] sm:$0xff]
  %v163 = vld [vmem:[#allocation2 + $0x40] sm:$0xff]
  %v164 = vld [vmem:[#allocation2 + $0x48] sm:$0xff]
  %v165 = vld [vmem:[#allocation2 + $0x50] sm:$0xff]
  %v166 = vld [vmem:[#allocation2 + $0x58] sm:$0xff]
  %v167 = vld [vmem:[#allocation2 + $0x60] sm:$0xff]
  %v168 = vld [vmem:[#allocation2 + $0x68] sm:$0xff]
  %v169 = vld [vmem:[#allocation2 + $0x70] sm:$0xff]
  %v170 = vld [vmem:[#allocation2 + $0x78] sm:$0xff]
  %v171 = vld [vmem:[%s0] sm:$0xf]
  %v172 = vld [vmem:[%s0 + $0x4] sm:$0xf]
  %v173 = vld [vmem:[%s0 + $0x8] sm:$0xf]
  %v174 = vld [vmem:[%s0 + $0xc] sm:$0xf]
  %v175 = vld [vmem:[%s0 + $0x10] sm:$0xf]
  %v176 = vld [vmem:[%s0 + $0x14] sm:$0xf]
  %v177 = vld [vmem:[%s0 + $0x18] sm:$0xf]
  %v178 = vld [vmem:[%s0 + $0x1c] sm:$0xf]
  %v179 = vld [vmem:[%s0 + $0x20] sm:$0xf]
  %v180 = vld [vmem:[%s0 + $0x24] sm:$0xf]
  %v181 = vld [vmem:[%s0 + $0x28] sm:$0xf]
  %v182 = vld [vmem:[%s0 + $0x2c] sm:$0xf]
  %v183 = vld [vmem:[%s0 + $0x30] sm:$0xf]
  %v184 = vld [vmem:[%s0 + $0x34] sm:$0xf]
  %v185 = vld [vmem:[%s0 + $0x38] sm:$0xf]
  %v186 = vld [vmem:[%s0 + $0x3c] sm:$0xf]
  %v187 = vld [vmem:[%s1] sm:$0xf]
  %v188 = vld [vmem:[%s1 + $0x4] sm:$0xf]
  %v189 = vld [vmem:[%s1 + $0x8] sm:$0xf]
  %v190 = vld [vmem:[%s1 + $0xc] sm:$0xf]
  %v191 = vld [vmem:[%s1 + $0x10] sm:$0xf]
  %v192 = vld [vmem:[%s1 + $0x14] sm:$0xf]
  %v193 = vld [vmem:[%s1 + $0x18] sm:$0xf]
  %v194 = vld [vmem:[%s1 + $0x1c] sm:$0xf]
  %v195 = vld [vmem:[%s1 + $0x20] sm:$0xf]
  %v196 = vld [vmem:[%s1 + $0x24] sm:$0xf]
  %v197 = vld [vmem:[%s1 + $0x28] sm:$0xf]
  %v198 = vld [vmem:[%s1 + $0x2c] sm:$0xf]
  %v199 = vld [vmem:[%s1 + $0x30] sm:$0xf]
  %v200 = vld [vmem:[%s1 + $0x34] sm:$0xf]
  %v201 = vld [vmem:[%s1 + $0x38] sm:$0xf]
  %v202 = vld [vmem:[%s1 + $0x3c] sm:$0xf]
  %v219 = vunpack.c.l.b16 %v171
  %v220 = vunpack.c.l.b16 %v172
  %v221 = vunpack.c.l.b16 %v173
  %v222 = vunpack.c.l.b16 %v174
  %v223 = vunpack.c.l.b16 %v175
  %v224 = vunpack.c.l.b16 %v176
  %v225 = vunpack.c.l.b16 %v177
  %v226 = vunpack.c.l.b16 %v178
  %v227 = vunpack.c.l.b16 %v179
  %v228 = vunpack.c.l.b16 %v180
  %v229 = vunpack.c.l.b16 %v181
  %v230 = vunpack.c.l.b16 %v182
  %v231 = vunpack.c.l.b16 %v183
  %v232 = vunpack.c.l.b16 %v184
  %v233 = vunpack.c.l.b16 %v185
  %v234 = vunpack.c.l.b16 %v186
  %v235 = vpack.c.b16 %v220, %v219
  %v236 = vpack.c.b16 %v222, %v221
  %v237 = vpack.c.b16 %v224, %v223
  %v238 = vpack.c.b16 %v226, %v225
  %v239 = vpack.c.b16 %v228, %v227
  %v240 = vpack.c.b16 %v230, %v229
  %v241 = vpack.c.b16 %v232, %v231
  %v242 = vpack.c.b16 %v234, %v233
  %v267 = vunpack.c.l.b16 %v187
  %v268 = vunpack.c.l.b16 %v188
  %v269 = vunpack.c.l.b16 %v189
  %v270 = vunpack.c.l.b16 %v190
  %v271 = vunpack.c.l.b16 %v191
  %v272 = vunpack.c.l.b16 %v192
  %v273 = vunpack.c.l.b16 %v193
  %v274 = vunpack.c.l.b16 %v194
  %v275 = vunpack.c.l.b16 %v195
  %v276 = vunpack.c.l.b16 %v196
  %v277 = vunpack.c.l.b16 %v197
  %v278 = vunpack.c.l.b16 %v198
  %v279 = vunpack.c.l.b16 %v199
  %v280 = vunpack.c.l.b16 %v200
  %v281 = vunpack.c.l.b16 %v201
  %v282 = vunpack.c.l.b16 %v202
  %v283 = vpack.c.b16 %v268, %v267
  %v284 = vpack.c.b16 %v270, %v269
  %v285 = vpack.c.b16 %v272, %v271
  %v286 = vpack.c.b16 %v274, %v273
  %v287 = vpack.c.b16 %v276, %v275
  %v288 = vpack.c.b16 %v278, %v277
  %v289 = vpack.c.b16 %v280, %v279
  %v290 = vpack.c.b16 %v282, %v281
  %299 = vmatprep.subr.bf16.mxu0 0
  %300 = vmatpush1.bf16.msra.mxu0 %v283
  %301 = vmatprep.subr.bf16.mxu0 0
  %302 = vmatpush1.bf16.msra.mxu0 %v284
  %303 = vmatprep.subr.bf16.mxu0 0
  %304 = vmatpush1.bf16.msra.mxu0 %v285
  %305 = vmatprep.subr.bf16.mxu0 0
  %306 = vmatpush1.bf16.msra.mxu0 %v286
  %307 = vmatprep.subr.bf16.mxu0 0
  %308 = vmatpush1.bf16.msra.mxu0 %v287
  %309 = vmatprep.subr.bf16.mxu0 0
  %310 = vmatpush1.bf16.msra.mxu0 %v288
  %311 = vmatprep.subr.bf16.mxu0 0
  %312 = vmatpush1.bf16.msra.mxu0 %v289
  %313 = vmatprep.subr.bf16.mxu0 0
  %314 = vmatpush1.bf16.msra.mxu0 %v290
  %315 = vmatprep.subr.bf16.mxu0 0
  %316 = vmatpush1.bf16.msra.mxu0 0
  %317 = vmatprep.subr.bf16.mxu0 0
  %318 = vmatpush1.bf16.msra.mxu0 0
  %319 = vmatprep.subr.bf16.mxu0 0
  %320 = vmatpush1.bf16.msra.mxu0 0
  %321 = vmatprep.subr.bf16.mxu0 0
  %322 = vmatpush1.bf16.msra.mxu0 0
  %323 = vmatprep.subr.bf16.mxu0 0
  %324 = vmatpush1.bf16.msra.mxu0 0
  %325 = vmatprep.subr.bf16.mxu0 0
  %326 = vmatpush1.bf16.msra.mxu0 0
  %327 = vmatprep.subr.bf16.mxu0 0
  %328 = vmatpush1.bf16.msra.mxu0 0
  %329 = vmatprep.subr.bf16.mxu0 0
  %330 = vmatpush1.bf16.msra.mxu0 0
  %331 = vmatprep.mubr.bf16.mxu0 0
  %332 = vmatmul.mubr.bf16.gmra.mrb[0].mxu0 %v235
  %v333 = vpop.f32.mrb[0].mxu0
  %v334 = vadd.f32 0.0, %v333
  %v335 = vpop.f32.mrb[0].mxu0
  %v336 = vpop.f32.mrb[0].mxu0
  %v337 = vadd.f32 0.0, %v336
  %v338 = vpop.f32.mrb[0].mxu0
  %339 = vmatprep.mubr.bf16.mxu0 0
  %340 = vmatmul.mubr.bf16.gmra.mrb[0].mxu0 %v236
  %v341 = vpop.f32.mrb[0].mxu0
  %v342 = vadd.f32 0.0, %v341
  %v343 = vpop.f32.mrb[0].mxu0
  %v344 = vpop.f32.mrb[0].mxu0
  %v345 = vadd.f32 0.0, %v344
  %v346 = vpop.f32.mrb[0].mxu0
  %347 = vmatprep.mubr.bf16.mxu0 0
  %348 = vmatmul.mubr.bf16.gmra.mrb[0].mxu0 %v237
  %v349 = vpop.f32.mrb[0].mxu0
  %v350 = vadd.f32 0.0, %v349
  %v351 = vpop.f32.mrb[0].mxu0
  %v352 = vpop.f32.mrb[0].mxu0
  %v353 = vadd.f32 0.0, %v352
  %v354 = vpop.f32.mrb[0].mxu0
  %355 = vmatprep.mubr.bf16.mxu0 0
  %356 = vmatmul.mubr.bf16.gmra.mrb[0].mxu0 %v238
  %v357 = vpop.f32.mrb[0].mxu0
  %v358 = vadd.f32 0.0, %v357
  %v359 = vpop.f32.mrb[0].mxu0
  %v360 = vpop.f32.mrb[0].mxu0
  %v361 = vadd.f32 0.0, %v360
  %v362 = vpop.f32.mrb[0].mxu0
  %363 = vmatprep.mubr.bf16.mxu0 0
  %364 = vmatmul.mubr.bf16.gmra.mrb[0].mxu0 %v239
  %v365 = vpop.f32.mrb[0].mxu0
  %v366 = vadd.f32 0.0, %v365
  %v367 = vpop.f32.mrb[0].mxu0
  %v368 = vpop.f32.mrb[0].mxu0
  %v369 = vadd.f32 0.0, %v368
  %v370 = vpop.f32.mrb[0].mxu0
  %371 = vmatprep.mubr.bf16.mxu0 0
  %372 = vmatmul.mubr.bf16.gmra.mrb[0].mxu0 %v240
  %v373 = vpop.f32.mrb[0].mxu0
  %v374 = vadd.f32 0.0, %v373
  %v375 = vpop.f32.mrb[0].mxu0
  %v376 = vpop.f32.mrb[0].mxu0
  %v377 = vadd.f32 0.0, %v376
  %v378 = vpop.f32.mrb[0].mxu0
  %379 = vmatprep.mubr.bf16.mxu0 0
  %380 = vmatmul.mubr.bf16.gmra.mrb[0].mxu0 %v241
  %v381 = vpop.f32.mrb[0].mxu0
  %v382 = vadd.f32 0.0, %v381
  %v383 = vpop.f32.mrb[0].mxu0
  %v384 = vpop.f32.mrb[0].mxu0
  %v385 = vadd.f32 0.0, %v384
  %v386 = vpop.f32.mrb[0].mxu0
  %387 = vmatprep.mubr.bf16.mxu0 0
  %388 = vmatmul.mubr.bf16.gmra.mrb[0].mxu0 %v242
  %v389 = vpop.f32.mrb[0].mxu0
  %v390 = vadd.f32 0.0, %v389
  %v391 = vpop.f32.mrb[0].mxu0
  %v392 = vpop.f32.mrb[0].mxu0
  %v393 = vadd.f32 0.0, %v392
  %v394 = vpop.f32.mrb[0].mxu0
  %395 = vdwg.mxu0
  %v396 = vadd.f32 %v155, %v334
  %v397 = vadd.f32 %v156, %v337
  %v398 = vadd.f32 %v157, %v342
  %v399 = vadd.f32 %v158, %v345
  %v400 = vadd.f32 %v159, %v350
  %v401 = vadd.f32 %v160, %v353
  %v402 = vadd.f32 %v161, %v358
  %v403 = vadd.f32 %v162, %v361
  %v404 = vadd.f32 %v163, %v366
  %v405 = vadd.f32 %v164, %v369
  %v406 = vadd.f32 %v165, %v374
  %v407 = vadd.f32 %v166, %v377
  %v408 = vadd.f32 %v167, %v382
  %v409 = vadd.f32 %v168, %v385
  %v410 = vadd.f32 %v169, %v390
  %v411 = vadd.f32 %v170, %v393
  %vm412 = vcmask 261120
  %413 = vst.msk [vmem:[#allocation2] sm:$0xff] %vm412, %v396
  %414 = vst.msk [vmem:[#allocation2 + $0x8] sm:$0xff] %vm412, %v397
  %415 = vst.msk [vmem:[#allocation2 + $0x10] sm:$0xff] %vm412, %v398
  %416 = vst.msk [vmem:[#allocation2 + $0x18] sm:$0xff] %vm412, %v399
  %417 = vst.msk [vmem:[#allocation2 + $0x20] sm:$0xff] %vm412, %v400
  %418 = vst.msk [vmem:[#allocation2 + $0x28] sm:$0xff] %vm412, %v401
  %419 = vst.msk [vmem:[#allocation2 + $0x30] sm:$0xff] %vm412, %v402
  %420 = vst.msk [vmem:[#allocation2 + $0x38] sm:$0xff] %vm412, %v403
  %421 = vst.msk [vmem:[#allocation2 + $0x40] sm:$0xff] %vm412, %v404
  %422 = vst.msk [vmem:[#allocation2 + $0x48] sm:$0xff] %vm412, %v405
  %423 = vst.msk [vmem:[#allocation2 + $0x50] sm:$0xff] %vm412, %v406
  %424 = vst.msk [vmem:[#allocation2 + $0x58] sm:$0xff] %vm412, %v407
  %425 = vst.msk [vmem:[#allocation2 + $0x60] sm:$0xff] %vm412, %v408
  %426 = vst.msk [vmem:[#allocation2 + $0x68] sm:$0xff] %vm412, %v409
  %427 = vst.msk [vmem:[#allocation2 + $0x70] sm:$0xff] %vm412, %v410
  %428 = vst.msk [vmem:[#allocation2 + $0x78] sm:$0xff] %vm412, %v411
  // Predicated region
  $region26: #{tpu_custom_call.1} parent=0 // pred_check
    %p429 = pneg %p21
  $region27: #{tpu_custom_call.1} parent=0 // pred_check_branch
    %431 = sbr.rel (%p429) target = $region29
  $region28: #{tpu_custom_call.1} parent=0 // pred_region
    %v432 = vld [vmem:[#allocation2] sm:$0xff]
    %v433 = vld [vmem:[#allocation2 + $0x8] sm:$0xff]
    %v434 = vld [vmem:[#allocation2 + $0x10] sm:$0xff]
    %v435 = vld [vmem:[#allocation2 + $0x18] sm:$0xff]
    %v436 = vld [vmem:[#allocation2 + $0x20] sm:$0xff]
    %v437 = vld [vmem:[#allocation2 + $0x28] sm:$0xff]
    %v438 = vld [vmem:[#allocation2 + $0x30] sm:$0xff]
    %v439 = vld [vmem:[#allocation2 + $0x38] sm:$0xff]
    %v440 = vld [vmem:[#allocation2 + $0x40] sm:$0xff]
    %v441 = vld [vmem:[#allocation2 + $0x48] sm:$0xff]
    %v442 = vld [vmem:[#allocation2 + $0x50] sm:$0xff]
    %v443 = vld [vmem:[#allocation2 + $0x58] sm:$0xff]
    %v444 = vld [vmem:[#allocation2 + $0x60] sm:$0xff]
    %v445 = vld [vmem:[#allocation2 + $0x68] sm:$0xff]
    %v446 = vld [vmem:[#allocation2 + $0x70] sm:$0xff]
    %v447 = vld [vmem:[#allocation2 + $0x78] sm:$0xff]
    %v448 = vpack.c.bf16 %v433, %v432
    %v449 = vpack.c.bf16 %v435, %v434
    %v450 = vpack.c.bf16 %v437, %v436
    %v451 = vpack.c.bf16 %v439, %v438
    %v452 = vpack.c.bf16 %v441, %v440
    %v453 = vpack.c.bf16 %v443, %v442
    %v454 = vpack.c.bf16 %v445, %v444
    %v455 = vpack.c.bf16 %v447, %v446
    %v456 = vld [vmem:[%s3] sm:$0xf]
    %v457 = vld [vmem:[%s3 + $0x4] sm:$0xf]
    %v458 = vld [vmem:[%s3 + $0x8] sm:$0xf]
    %v459 = vld [vmem:[%s3 + $0xc] sm:$0xf]
    %v460 = vld [vmem:[%s3 + $0x10] sm:$0xf]
    %v461 = vld [vmem:[%s3 + $0x14] sm:$0xf]
    %v462 = vld [vmem:[%s3 + $0x18] sm:$0xf]
    %v463 = vld [vmem:[%s3 + $0x1c] sm:$0xf]
    %v464 = vld [vmem:[%s4] sm:$0x1]
    %v466 = vlaneseq
    %v467 = vshrl.u32 %v466, 7
    %v468 = vsub.s32 0, %v467
    %v469 = vrot.slane %v464, %v468
    %v479 = vunpack.c.l.b16 %v456
    %v480 = vunpack.c.l.b16 %v457
    %v481 = vunpack.c.l.b16 %v458
    %v482 = vunpack.c.l.b16 %v459
    %v483 = vunpack.c.l.b16 %v460
    %v484 = vunpack.c.l.b16 %v461
    %v485 = vunpack.c.l.b16 %v462
    %v486 = vunpack.c.l.b16 %v463
    %v487 = vpack.c.b16 %v480, %v479
    %v488 = vpack.c.b16 %v482, %v481
    %v489 = vpack.c.b16 %v484, %v483
    %v490 = vpack.c.b16 %v486, %v485
    %vm495 = vcmask 523264
    %v497 = vsel %vm495, %v448, 0
    %v500 = vsel %vm495, %v449, 0
    %v503 = vsel %vm495, %v450, 0
    %v506 = vsel %vm495, %v451, 0
    %v509 = vsel %vm495, %v452, 0
    %v512 = vsel %vm495, %v453, 0
    %v515 = vsel %vm495, %v454, 0
    %v518 = vsel %vm495, %v455, 0
    %520 = vmatprep.subr.bf16.mxu0 0
    %521 = vmatpush1.bf16.msra.mxu0 %v487
    %522 = vmatprep.subr.bf16.mxu0 0
    %523 = vmatpush1.bf16.msra.mxu0 %v488
    %524 = vmatprep.subr.bf16.mxu0 0
    %525 = vmatpush1.bf16.msra.mxu0 %v489
    %526 = vmatprep.subr.bf16.mxu0 0
    %527 = vmatpush1.bf16.msra.mxu0 %v490
    %528 = vmatprep.subr.bf16.mxu0 0
    %529 = vmatpush1.bf16.msra.mxu0 0
    %530 = vmatprep.subr.bf16.mxu0 0
    %531 = vmatpush1.bf16.msra.mxu0 0
    %532 = vmatprep.subr.bf16.mxu0 0
    %533 = vmatpush1.bf16.msra.mxu0 0
    %534 = vmatprep.subr.bf16.mxu0 0
    %535 = vmatpush1.bf16.msra.mxu0 0
    %536 = vmatprep.subr.bf16.mxu0 0
    %537 = vmatpush1.bf16.msra.mxu0 0
    %538 = vmatprep.subr.bf16.mxu0 0
    %539 = vmatpush1.bf16.msra.mxu0 0
    %540 = vmatprep.subr.bf16.mxu0 0
    %541 = vmatpush1.bf16.msra.mxu0 0
    %542 = vmatprep.subr.bf16.mxu0 0
    %543 = vmatpush1.bf16.msra.mxu0 0
    %544 = vmatprep.subr.bf16.mxu0 0
    %545 = vmatpush1.bf16.msra.mxu0 0
    %546 = vmatprep.subr.bf16.mxu0 0
    %547 = vmatpush1.bf16.msra.mxu0 0
    %548 = vmatprep.subr.bf16.mxu0 0
    %549 = vmatpush1.bf16.msra.mxu0 0
    %550 = vmatprep.subr.bf16.mxu0 0
    %551 = vmatpush1.bf16.msra.mxu0 0
    %552 = vmatprep.mubr.bf16.mxu0 0
    %553 = vmatmul.mubr.bf16.gmra.mrb[0].mxu0 %v497
    %v554 = vpop.f32.mrb[0].mxu0
    %v555 = vadd.f32 %v469, %v554
    %v556 = vpop.f32.mrb[0].mxu0
    %v557 = vpop.f32.mrb[0].mxu0
    %v558 = vadd.f32 %v469, %v557
    %v559 = vpop.f32.mrb[0].mxu0
    %560 = vmatprep.mubr.bf16.mxu0 0
    %561 = vmatmul.mubr.bf16.gmra.mrb[0].mxu0 %v500
    %v562 = vpop.f32.mrb[0].mxu0
    %v563 = vadd.f32 %v469, %v562
    %v564 = vpop.f32.mrb[0].mxu0
    %v565 = vpop.f32.mrb[0].mxu0
    %v566 = vadd.f32 %v469, %v565
    %v567 = vpop.f32.mrb[0].mxu0
    %568 = vmatprep.mubr.bf16.mxu0 0
    %569 = vmatmul.mubr.bf16.gmra.mrb[0].mxu0 %v503
    %v570 = vpop.f32.mrb[0].mxu0
    %v571 = vadd.f32 %v469, %v570
    %v572 = vpop.f32.mrb[0].mxu0
    %v573 = vpop.f32.mrb[0].mxu0
    %v574 = vadd.f32 %v469, %v573
    %v575 = vpop.f32.mrb[0].mxu0
    %576 = vmatprep.mubr.bf16.mxu0 0
    %577 = vmatmul.mubr.bf16.gmra.mrb[0].mxu0 %v506
    %v578 = vpop.f32.mrb[0].mxu0
    %v579 = vadd.f32 %v469, %v578
    %v580 = vpop.f32.mrb[0].mxu0
    %v581 = vpop.f32.mrb[0].mxu0
    %v582 = vadd.f32 %v469, %v581
    %v583 = vpop.f32.mrb[0].mxu0
    %584 = vmatprep.mubr.bf16.mxu0 0
    %585 = vmatmul.mubr.bf16.gmra.mrb[0].mxu0 %v509
    %v586 = vpop.f32.mrb[0].mxu0
    %v587 = vadd.f32 %v469, %v586
    %v588 = vpop.f32.mrb[0].mxu0
    %v589 = vpop.f32.mrb[0].mxu0
    %v590 = vadd.f32 %v469, %v589
    %v591 = vpop.f32.mrb[0].mxu0
    %592 = vmatprep.mubr.bf16.mxu0 0
    %593 = vmatmul.mubr.bf16.gmra.mrb[0].mxu0 %v512
    %v594 = vpop.f32.mrb[0].mxu0
    %v595 = vadd.f32 %v469, %v594
    %v596 = vpop.f32.mrb[0].mxu0
    %v597 = vpop.f32.mrb[0].mxu0
    %v598 = vadd.f32 %v469, %v597
    %v599 = vpop.f32.mrb[0].mxu0
    %600 = vmatprep.mubr.bf16.mxu0 0
    %601 = vmatmul.mubr.bf16.gmra.mrb[0].mxu0 %v515
    %v602 = vpop.f32.mrb[0].mxu0
    %v603 = vadd.f32 %v469, %v602
    %v604 = vpop.f32.mrb[0].mxu0
    %v605 = vpop.f32.mrb[0].mxu0
    %v606 = vadd.f32 %v469, %v605
    %v607 = vpop.f32.mrb[0].mxu0
    %608 = vmatprep.mubr.bf16.mxu0 0
    %609 = vmatmul.mubr.bf16.gmra.mrb[0].mxu0 %v518
    %v610 = vpop.f32.mrb[0].mxu0
    %v611 = vadd.f32 %v469, %v610
    %v612 = vpop.f32.mrb[0].mxu0
    %v613 = vpop.f32.mrb[0].mxu0
    %v614 = vadd.f32 %v469, %v613
    %v615 = vpop.f32.mrb[0].mxu0
    %616 = vdwg.mxu0
    %v617 = vmax.f32 %v555, 0.0
    %v618 = vmax.f32 %v558, 0.0
    %v619 = vmax.f32 %v563, 0.0
    %v620 = vmax.f32 %v566, 0.0
    %v621 = vmax.f32 %v571, 0.0
    %v622 = vmax.f32 %v574, 0.0
    %v623 = vmax.f32 %v579, 0.0
    %v624 = vmax.f32 %v582, 0.0
    %v625 = vmax.f32 %v587, 0.0
    %v626 = vmax.f32 %v590, 0.0
    %v627 = vmax.f32 %v595, 0.0
    %v628 = vmax.f32 %v598, 0.0
    %v629 = vmax.f32 %v603, 0.0
    %v630 = vmax.f32 %v606, 0.0
    %v631 = vmax.f32 %v611, 0.0
    %v632 = vmax.f32 %v614, 0.0
    %v633 = vpack.c.bf16 %v618, %v617
    %v634 = vpack.c.bf16 %v620, %v619
    %v635 = vpack.c.bf16 %v622, %v621
    %v636 = vpack.c.bf16 %v624, %v623
    %v637 = vpack.c.bf16 %v626, %v625
    %v638 = vpack.c.bf16 %v628, %v627
    %v639 = vpack.c.bf16 %v630, %v629
    %v640 = vpack.c.bf16 %v632, %v631
    %v649 = vunpack.c.l.b16 %v633
    %v650 = vunpack.c.h.b16 %v633
    %v651 = vunpack.c.l.b16 %v634
    %v652 = vunpack.c.h.b16 %v634
    %v653 = vunpack.c.l.b16 %v635
    %v654 = vunpack.c.h.b16 %v635
    %v655 = vunpack.c.l.b16 %v636
    %v656 = vunpack.c.h.b16 %v636
    %v657 = vunpack.c.l.b16 %v637
    %v658 = vunpack.c.h.b16 %v637
    %v659 = vunpack.c.l.b16 %v638
    %v660 = vunpack.c.h.b16 %v638
    %v661 = vunpack.c.l.b16 %v639
    %v662 = vunpack.c.h.b16 %v639
    %v663 = vunpack.c.l.b16 %v640
    %v664 = vunpack.c.h.b16 %v640
    %v665 = vpack.c.b16 %v649, %v649
    %v666 = vpack.c.b16 %v650, %v650
    %v667 = vpack.c.b16 %v651, %v651
    %v668 = vpack.c.b16 %v652, %v652
    %v669 = vpack.c.b16 %v653, %v653
    %v670 = vpack.c.b16 %v654, %v654
    %v671 = vpack.c.b16 %v655, %v655
    %v672 = vpack.c.b16 %v656, %v656
    %v673 = vpack.c.b16 %v657, %v657
    %v674 = vpack.c.b16 %v658, %v658
    %v675 = vpack.c.b16 %v659, %v659
    %v676 = vpack.c.b16 %v660, %v660
    %v677 = vpack.c.b16 %v661, %v661
    %v678 = vpack.c.b16 %v662, %v662
    %v679 = vpack.c.b16 %v663, %v663
    %v680 = vpack.c.b16 %v664, %v664
    %vm697 = vcmask 519168
    %698 = vst.msk [vmem:[%s5] sm:$0xf] %vm697, %v665
    %699 = vst.msk [vmem:[%s5 + $0x4] sm:$0xf] %vm697, %v666
    %700 = vst.msk [vmem:[%s5 + $0x8] sm:$0xf] %vm697, %v667
    %701 = vst.msk [vmem:[%s5 + $0xc] sm:$0xf] %vm697, %v668
    %702 = vst.msk [vmem:[%s5 + $0x10] sm:$0xf] %vm697, %v669
    %703 = vst.msk [vmem:[%s5 + $0x14] sm:$0xf] %vm697, %v670
    %704 = vst.msk [vmem:[%s5 + $0x18] sm:$0xf] %vm697, %v671
    %705 = vst.msk [vmem:[%s5 + $0x1c] sm:$0xf] %vm697, %v672
    %706 = vst.msk [vmem:[%s5 + $0x20] sm:$0xf] %vm697, %v673
    %707 = vst.msk [vmem:[%s5 + $0x24] sm:$0xf] %vm697, %v674
    %708 = vst.msk [vmem:[%s5 + $0x28] sm:$0xf] %vm697, %v675
    %709 = vst.msk [vmem:[%s5 + $0x2c] sm:$0xf] %vm697, %v676
    %710 = vst.msk [vmem:[%s5 + $0x30] sm:$0xf] %vm697, %v677
    %711 = vst.msk [vmem:[%s5 + $0x34] sm:$0xf] %vm697, %v678
    %712 = vst.msk [vmem:[%s5 + $0x38] sm:$0xf] %vm697, %v679
    %713 = vst.msk [vmem:[%s5 + $0x3c] sm:$0xf] %vm697, %v680
  $region29: #{tpu_custom_call.1} parent=0 // pred_fallthru
    _
  // Predicated region
  $region30: #{tpu_custom_call.1} parent=0 // pred_check
    _
  $region31: #{tpu_custom_call.1} parent=0 // pred_check_branch
    %715 = sbr.rel (0) target = $region33
  $region32: #{tpu_custom_call.1} parent=0 // pred_region
    _
  $region33: #{tpu_custom_call.1} parent=0 // pred_fallthru
    _
  // Predicated region
  $region34: #{tpu_custom_call.1} parent=0 // pred_check
    _
  $region35: #{tpu_custom_call.1} parent=0 // pred_check_branch
    %717 = sbr.rel (0) target = $region37
  $region36: #{tpu_custom_call.1} parent=0 // pred_region
    _
  $region37: #{tpu_custom_call.1} parent=0 // pred_fallthru
    _

</llo_original>
